<compile_context>
chip_gen: v7x
topology: tpu7x:2x2x1
jax: 0.10.0
libtpu: 0.0.40
codegen_flags: <defaults>
</compile_context>

<pallas_src>
import functools

import jax
import jax.numpy as jnp
from jax import lax
from jax.experimental import pallas as pl
from jax.experimental.pallas import tpu as pltpu


_HW_TILE_CAP = 32 * 1024          # lanes per H*W tile (keeps the (8, hw_t) acc ~1 MiB)
_MAX_BLOCK_BYTES = 16 * 1024 * 1024


def _round_down(x, m):
    return (x // m) * m


def _vmem_capacity_bytes():
    try:
        info = pltpu.get_tpu_info()
        for name in ("vmem_capacity_bytes", "vmem_bytes", "vmem_size_bytes"):
            v = getattr(info, name, None)
            if v:
                return int(v)
    except Exception:
        pass
    return 64 * 1024 * 1024       # conservative (v7x-sized) fallback


def _loss_kernel(inv_ref, tgt_ref, area_ref, o_ref, acc_ref, *,
                 tc, hw, bt, hw_t, rc, acc_rows, tc_steps,
                 needs_row_mask, needs_lane_mask):
    p = pl.program_id(0)          # megacore split of the T*C block range
    h = pl.program_id(1)          # H*W lane tile
    i = pl.program_id(2)          # reduction steps over T*C blocks

    @pl.when(i == 0)
    def _init():
        acc_ref[...] = jnp.zeros_like(acc_ref)

    # Logical (unclamped) first fused row of this block. When the index_map
    # clamps a fully out-of-range block onto the last valid one, all logical
    # rows are >= tc and the row mask zeroes the duplicated data.
    row0 = (p * tc_steps + i) * bt

    if needs_row_mask:
        row_iota = lax.broadcasted_iota(jnp.int32, (rc, hw_t), 0)

    n_chunks = bt // rc

    def chunk(r, carry):
        start = r * rc
        if not isinstance(start, int):
            start = pl.multiple_of(start, rc)
        x = inv_ref[pl.ds(start, rc), :].astype(jnp.float32)
        y = tgt_ref[pl.ds(start, rc), :].astype(jnp.float32)
        d = x - y
        d2 = d * d
        if needs_row_mask:
            limit = tc - (row0 + r * rc)          # rows past T*C contribute 0
            d2 = jnp.where(row_iota < limit, d2, 0.0)
        if rc != acc_rows:
            d2 = d2.reshape(rc // acc_rows, acc_rows, hw_t).sum(axis=0)
        acc_ref[...] += d2
        return carry

    if n_chunks <= 4:
        for r in range(n_chunks):
            chunk(r, 0)
    else:
        lax.fori_loop(0, n_chunks, chunk, 0)

    # Epilogue: fold sublanes, weight by cell area, emit a lane-dense partial.
    @pl.when(i == pl.num_programs(2) - 1)
    def _epilogue():
        col = jnp.sum(acc_ref[...], axis=0, keepdims=True)     # (1, hw_t)
        w = col * area_ref[...]
        if needs_lane_mask:
            lane_iota = lax.broadcasted_iota(jnp.int32, (1, hw_t), 1)
            w = jnp.where(lane_iota < (hw - h * hw_t), w, 0.0)
        o_ref[...] = w.reshape(1, 1, hw_t)


def cell_area_weighted_loss(invar, outvar, area, *, block_tc=None, hw_tile=None):
    """invar, outvar: [T, C, H, W]; area: [H, W] -> scalar float32 loss."""
    T, C, H, W = invar.shape
    assert outvar.shape == (T, C, H, W)
    assert area.shape == (H, W)

    TC = T * C
    HW = H * W

    # Lane-dense [T*C, H*W] slab (contiguous reshape; no HBM copy, no pad).
    inv = invar.reshape(TC, HW)
    tgt = outvar.reshape(TC, HW)
    area_flat = area.reshape(1, HW).astype(jnp.float32)

    itemsize = jnp.dtype(invar.dtype).itemsize
    sub = max(8, 32 // itemsize)              # sublane multiple: 8 f32, 16 bf16

    # Generation-aware VMEM budget (~25% headroom: ~48 MiB v7x, ~96 MiB v5e/v6e).
    budget = _vmem_capacity_bytes() * 3 // 4

    # ---- H*W (lane) tiling --------------------------------------------------
    if hw_tile is not None:
        hw_t = max(128, _round_down(hw_tile, 128))
        hw_t = HW if hw_t >= HW else hw_t
    else:
        hw_t = HW if HW <= _HW_TILE_CAP else _HW_TILE_CAP
    n_hw = pl.cdiv(HW, hw_t)

    # ---- T*C (sublane) tiling -----------------------------------------------
    if TC < sub:
        bt = TC                                # single full-extent (sub-8) block
    else:
        if block_tc is not None:
            bt = max(sub, _round_down(min(block_tc, TC), sub))
        else:
            # acc + area/out double-buffers + slack; split the rest over
            # 2 inputs x 2 pipeline buffers, capped at ~16 MiB per block.
            fixed = 8 * hw_t * 4 + 4 * hw_t * 4 + (2 << 20)
            avail = max(budget - fixed, 4 * sub * hw_t * itemsize)
            per_block = min(avail // 4, _MAX_BLOCK_BYTES)
            bt = max(sub, _round_down(per_block // (hw_t * itemsize), sub))
        bt = min(bt, _round_down(TC, sub))

    n_tc_blocks = pl.cdiv(TC, bt)

    # Megacore: split the T*C block range across (up to) two TensorCores.
    # Harmless serialization on single-core chips (v5e/v6e).
    P = 2 if n_tc_blocks >= 2 else 1
    tc_steps = pl.cdiv(n_tc_blocks, P)
    last_block = n_tc_blocks - 1

    needs_row_mask = (P * tc_steps * bt) > TC
    needs_lane_mask = (n_hw * hw_t) > HW

    # Rows processed per accumulator update (kept small so no big f32 temps).
    rc = min(sub, bt)
    if rc % 8 == 0:
        while rc < bt and rc * hw_t < 65536 and bt % (rc * 2) == 0:
            rc *= 2
        acc_rows = 8
    else:
        acc_rows = rc

    kernel = functools.partial(
        _loss_kernel, tc=TC, hw=HW, bt=bt, hw_t=hw_t, rc=rc, acc_rows=acc_rows,
        tc_steps=tc_steps, needs_row_mask=needs_row_mask,
        needs_lane_mask=needs_lane_mask)

    if P * tc_steps > n_tc_blocks:
        def in_map(p, h, i):
            # Clamp fully out-of-range blocks onto the last valid one; the
            # kernel's logical-row mask zeroes the duplicated data.
            return (jnp.minimum(p * tc_steps + i, last_block), h)
    else:
        def in_map(p, h, i):
            return (p * tc_steps + i, h)

    out = pl.pallas_call(
        kernel,
        out_shape=jax.ShapeDtypeStruct((P, 1, n_hw * hw_t), jnp.float32),
        grid_spec=pltpu.PrefetchScalarGridSpec(
            num_scalar_prefetch=0,
            grid=(P, n_hw, tc_steps),
            in_specs=[
                pl.BlockSpec((bt, hw_t), in_map),                  # invar
                pl.BlockSpec((bt, hw_t), in_map),                  # outvar
                pl.BlockSpec((1, hw_t), lambda p, h, i: (0, h)),   # area (per tile)
            ],
            out_specs=pl.BlockSpec((1, 1, hw_t), lambda p, h, i: (p, 0, h)),
            scratch_shapes=[pltpu.VMEM((acc_rows, hw_t), jnp.float32)],
        ),
        compiler_params=pltpu.CompilerParams(
            dimension_semantics=("parallel", "parallel", "arbitrary"),
            vmem_limit_bytes=int(budget),
        ),
    )(inv, tgt, area_flat)

    denom = jnp.float32(TC) * jnp.float32(HW)
    return jnp.sum(out) / denom


class CellAreaWeightedLossFunction:
    """Pallas-backed equivalent of the PyTorch module (holds the area weights)."""

    def __init__(self, area):
        self.area = area

    def __call__(self, invar, outvar):
        return cell_area_weighted_loss(invar, outvar, self.area)


def _reference_loss(invar, outvar, area):
    loss = (invar - outvar) ** 2
    loss = loss.mean(axis=(0, 1))
    loss = loss * area
    return loss.mean()


if __name__ == "__main__":
    key = jax.random.PRNGKey(0)
    k1, k2, k3 = jax.random.split(key, 3)

    # 1) Default heuristic path (shapes consistent with the module).
    T, C, H, W = 2, 4, 16, 16
    invar = jax.random.normal(k1, (T, C, H, W), dtype=jnp.float32)
    outvar = jax.random.normal(k2, (T, C, H, W), dtype=jnp.float32)
    area = jax.random.uniform(k3, (H, W), dtype=jnp.float32, minval=0.5, maxval=1.5)

    loss_fn = CellAreaWeightedLossFunction(area)
    loss = jax.block_until_ready(loss_fn(invar, outvar))
    ref = _reference_loss(invar, outvar, area)
    assert jnp.allclose(loss, ref, rtol=1e-5, atol=1e-6), (loss, ref)

    # 2) Exercise row/lane masking, HW tiling, megacore split and index clamping.
    T2, C2, H2, W2 = 1, 17, 16, 20
    inv2 = jax.random.normal(k1, (T2, C2, H2, W2), dtype=jnp.float32)
    out2 = jax.random.normal(k2, (T2, C2, H2, W2), dtype=jnp.float32)
    area2 = jax.random.uniform(k3, (H2, W2), dtype=jnp.float32, minval=0.5, maxval=1.5)

    loss2 = jax.block_until_ready(
        cell_area_weighted_loss(inv2, out2, area2, block_tc=8, hw_tile=128))
    ref2 = _reference_loss(inv2, out2, area2)
    assert jnp.allclose(loss2, ref2, rtol=1e-5, atol=1e-6), (loss2, ref2)

    print("KERNEL_OK")
</pallas_src>

<mosaic_0001>
module attributes {stable_mosaic.version = 11 : i64} {
  func.func @_loss_kernel(%arg0: i32, %arg1: i32, %arg2: i32, %arg3: memref<8x256xf32, #tpu.memory_space<vmem>>, %arg4: memref<8x256xf32, #tpu.memory_space<vmem>>, %arg5: memref<1x256xf32, #tpu.memory_space<vmem>>, %arg6: memref<1x1x256xf32, #tpu.memory_space<vmem>>, %arg7: memref<8x256xf32, #tpu.memory_space<vmem>>) attributes {dimension_semantics = [#tpu.dimension_semantics<parallel>, #tpu.dimension_semantics<parallel>, #tpu.dimension_semantics<arbitrary>], iteration_bounds = array<i64: 1, 1, 1>, scalar_prefetch = 0 : i64, scratch_operands = 1 : i64, tpu.core_type = #tpu.core_type<tc>, window_params = [{transform_indices = @transform_0, window_bounds = array<i64: 8, 256>}, {transform_indices = @transform_1, window_bounds = array<i64: 8, 256>}, {transform_indices = @transform_2, window_bounds = array<i64: 1, 256>}, {transform_indices = @transform_3, window_bounds = array<i64: 1, 1, 256>}]} {
    %c0_i32 = arith.constant 0 : i32
    %0 = arith.cmpi eq, %arg2, %c0_i32 : i32
    %1 = arith.extui %0 : i1 to i32
    %c0_i32_0 = arith.constant 0 : i32
    %2 = arith.cmpi ne, %1, %c0_i32_0 : i32
    scf.if %2 {
      %cst = arith.constant 0.000000e+00 : f32
      %13 = vector.broadcast %cst : f32 to vector<8x256xf32>
      %c0_10 = arith.constant 0 : index
      %c0_11 = arith.constant 0 : index
      %14 = vector.load %arg7[%c0_10, %c0_11] : memref<8x256xf32, #tpu.memory_space<vmem>>, vector<8x256xf32>
      tpu.vector_store %arg7[%c0_10, %c0_11], %13 {strides = array<i32>} : memref<8x256xf32, #tpu.memory_space<vmem>>, vector<8x256xf32>,
    } else {
    }
    %c0 = arith.constant 0 : index
    %c0_1 = arith.constant 0 : index
    %3 = vector.load %arg3[%c0, %c0_1] : memref<8x256xf32, #tpu.memory_space<vmem>>, vector<8x256xf32>
    %c0_2 = arith.constant 0 : index
    %c0_3 = arith.constant 0 : index
    %4 = vector.load %arg4[%c0_2, %c0_3] : memref<8x256xf32, #tpu.memory_space<vmem>>, vector<8x256xf32>
    %5 = arith.subf %3, %4 : vector<8x256xf32>
    %6 = arith.mulf %5, %5 : vector<8x256xf32>
    %c0_4 = arith.constant 0 : index
    %c0_5 = arith.constant 0 : index
    %7 = vector.load %arg7[%c0_4, %c0_5] : memref<8x256xf32, #tpu.memory_space<vmem>>, vector<8x256xf32>
    %8 = arith.addf %7, %6 : vector<8x256xf32>
    %c0_6 = arith.constant 0 : index
    %c0_7 = arith.constant 0 : index
    %9 = vector.load %arg7[%c0_6, %c0_7] : memref<8x256xf32, #tpu.memory_space<vmem>>, vector<8x256xf32>
    tpu.vector_store %arg7[%c0_6, %c0_7], %8 {strides = array<i32>} : memref<8x256xf32, #tpu.memory_space<vmem>>, vector<8x256xf32>,
    %c0_i32_8 = arith.constant 0 : i32
    %10 = arith.cmpi eq, %arg2, %c0_i32_8 : i32
    %11 = arith.extui %10 : i1 to i32
    %c0_i32_9 = arith.constant 0 : i32
    %12 = arith.cmpi ne, %11, %c0_i32_9 : i32
    scf.if %12 {
      %c0_10 = arith.constant 0 : index
      %c0_11 = arith.constant 0 : index
      %13 = vector.load %arg7[%c0_10, %c0_11] : memref<8x256xf32, #tpu.memory_space<vmem>>, vector<8x256xf32>
      %cst = arith.constant dense<0.000000e+00> : vector<256xf32>
      %14 = vector.multi_reduction <add>, %13, %cst [0] : vector<8x256xf32> to vector<256xf32>
      %15 = vector.shape_cast %14 : vector<256xf32> to vector<1x256xf32>
      %c0_12 = arith.constant 0 : index
      %c0_13 = arith.constant 0 : index
      %16 = vector.load %arg5[%c0_12, %c0_13] : memref<1x256xf32, #tpu.memory_space<vmem>>, vector<1x256xf32>
      %17 = arith.mulf %15, %16 : vector<1x256xf32>
      %18 = vector.shape_cast %17 : vector<1x256xf32> to vector<1x1x256xf32>
      %c0_14 = arith.constant 0 : index
      %c0_15 = arith.constant 0 : index
      %c0_16 = arith.constant 0 : index
      %19 = vector.load %arg6[%c0_14, %c0_15, %c0_16] : memref<1x1x256xf32, #tpu.memory_space<vmem>>, vector<1x1x256xf32>
      tpu.vector_store %arg6[%c0_14, %c0_15, %c0_16], %18 {strides = array<i32>} : memref<1x1x256xf32, #tpu.memory_space<vmem>>, vector<1x1x256xf32>,
    } else {
    }
    return
  }
  func.func @transform_0(%arg0: i32, %arg1: i32, %arg2: i32) -> (i32, i32) {
    %c1_i32 = arith.constant 1 : i32
    %0 = arith.muli %arg0, %c1_i32 : i32
    %1 = arith.addi %0, %arg2 : i32
    %c0_i32 = arith.constant 0 : i32
    return %1, %arg1 : i32, i32
  }
  func.func @transform_1(%arg0: i32, %arg1: i32, %arg2: i32) -> (i32, i32) {
    %c1_i32 = arith.constant 1 : i32
    %0 = arith.muli %arg0, %c1_i32 : i32
    %1 = arith.addi %0, %arg2 : i32
    %c0_i32 = arith.constant 0 : i32
    return %1, %arg1 : i32, i32
  }
  func.func @transform_2(%arg0: i32, %arg1: i32, %arg2: i32) -> (i32, i32) {
    %c0_i32 = arith.constant 0 : i32
    %c0_i32_0 = arith.constant 0 : i32
    return %c0_i32, %arg1 : i32, i32
  }
  func.func @transform_3(%arg0: i32, %arg1: i32, %arg2: i32) -> (i32, i32, i32) {
    %c0_i32 = arith.constant 0 : i32
    %c0_i32_0 = arith.constant 0 : i32
    return %arg0, %c0_i32, %arg1 : i32, i32, i32
  }
}

</mosaic_0001>

<llo_original>
// kernel: tpu_custom_call.1
$region0: #{tpu_custom_call.1}
  #allocation0 [shape = 'u32[]', space=smem, size = 0x4, offset = 0x4, fixed_abs, tag = 'smem constant byte address 0x4 - core index']
  #allocation1 [shape = 'u32[144,128]{1,0:T(1,128)}', space=vmem, size = 0x12000, scoped, tag = 'internal scratch']
  #allocation2 [shape = 'f32[8,256]{1,0:T(8,128)}', space=vmem, size = 0x2000, scoped, tag = 'scratch operand']
  %s0 = inlined_call_operand.hbm [shape: f32[8,256], index: 0, kind: input, shape index: {}]
  %s1 = inlined_call_operand.hbm [shape: f32[8,256], index: 1, kind: input, shape index: {}]
  %s2 = inlined_call_operand.vmem [shape: f32[1,256], index: 2, kind: input, shape index: {}]
  %s3 = inlined_call_operand.hbm [shape: f32[1,1,256], index: 3, kind: output, shape index: {}]
  %s4 = sld [smem:[#allocation0]]
  $region38: #{tpu_custom_call.1} parent=0
    _
  %s6 = ssub.s32 1, %s4
  %s7 = scalar_select 0, %s6, %s4
  $region1: #{tpu_custom_call.1} parent=0
    #allocation3 [shape = 'u8[8192]{0}', space=vmem, size = 0x2000, scoped, tag = 'input window, operand 0, single buffered']
    #allocation4 [shape = 's32[1]{0}', space=sflag, size = 0x4, scoped, tag = 'scoped memory for tpu_custom_call.1']
    #allocation5 [shape = 's32[1]{0}', space=sflag, size = 0x4, scoped, tag = 'scoped memory for tpu_custom_call.1']
    #allocation6 [shape = 'u8[8192]{0}', space=vmem, size = 0x2000, scoped, tag = 'input window, operand 1, single buffered']
    #allocation7 [shape = 's32[1]{0}', space=sflag, size = 0x4, scoped, tag = 'scoped memory for tpu_custom_call.1']
    #allocation8 [shape = 'u8[1024]{0}', space=vmem, size = 0x400, scoped, tag = 'output window, operand 0, single buffered']
    %8 = vsyncpa [#allocation4], 0
    %9 = vsyncpa [#allocation7], 0
    %10 = vsyncpa [#allocation5], 0
    // Predicated region
    $region2: #{tpu_custom_call.1} parent=1 // pred_check
      _
    $region3: #{tpu_custom_call.1} parent=1 // pred_check_branch
      %12 = sbr.rel (0) target = $region5
    $region4: #{tpu_custom_call.1} parent=1 // pred_region
      %s13 = sadd.s32 0, 0
      %s15 = ssub.s32 256, 256
      %16 = vsyncadd [#allocation4], %s15
      %s17 = smul.addr %s13, 2
      %s18 = smul.addr %s17, 128
      %s19 = scalar_lea.hbm %s0, %s18
      %s21 = sshll.u32 [#allocation3], 4
      %s22 = int_to_ptr.vmem [resolvable:$true] %s21
      %24 = dma.hbm_to_vmem [thread:$0]  %s19, 256, %s22, [#allocation4]
    $region5: #{tpu_custom_call.1} parent=1 // pred_fallthru
      _
    // Predicated region
    $region6: #{tpu_custom_call.1} parent=1 // pred_check
      _
    $region7: #{tpu_custom_call.1} parent=1 // pred_check_branch
      %26 = sbr.rel (0) target = $region9
    $region8: #{tpu_custom_call.1} parent=1 // pred_region
      %s27 = sadd.s32 0, 0
      %s29 = ssub.s32 256, 256
      %30 = vsyncadd [#allocation7], %s29
      %s31 = smul.addr %s27, 2
      %s32 = smul.addr %s31, 128
      %s33 = scalar_lea.hbm %s1, %s32
      %s35 = sshll.u32 [#allocation6], 4
      %s36 = int_to_ptr.vmem [resolvable:$true] %s35
      %38 = dma.hbm_to_vmem [thread:$0]  %s33, 256, %s36, [#allocation7]
    $region9: #{tpu_custom_call.1} parent=1 // pred_fallthru
      _
    // Predicated region
    $region10: #{tpu_custom_call.1} parent=1 // pred_check
      _
    $region11: #{tpu_custom_call.1} parent=1 // pred_check_branch
      %40 = sbr.rel (0) target = $region13
    $region12: #{tpu_custom_call.1} parent=1 // pred_region
      _
    $region13: #{tpu_custom_call.1} parent=1 // pred_fallthru
      _
    // Predicated region
    $region14: #{tpu_custom_call.1} parent=1 // pred_check
      _
    $region15: #{tpu_custom_call.1} parent=1 // pred_check_branch
      %42 = sbr.rel (0) target = $region17
    $region16: #{tpu_custom_call.1} parent=1 // pred_region
      %43 = dma.done [#allocation4], 256
    $region17: #{tpu_custom_call.1} parent=1 // pred_fallthru
      _
    // Predicated region
    $region18: #{tpu_custom_call.1} parent=1 // pred_check
      _
    $region19: #{tpu_custom_call.1} parent=1 // pred_check_branch
      %45 = sbr.rel (0) target = $region21
    $region20: #{tpu_custom_call.1} parent=1 // pred_region
      %46 = dma.done [#allocation7], 256
    $region21: #{tpu_custom_call.1} parent=1 // pred_fallthru
      _
    %s47 = sadd.s32 0, 0
    %s48 = sadd.s32 0, 0
    %p49 = scmp.eq.s32.totalorder 0, 0
    // Predicated region
    $region22: #{tpu_custom_call.1} parent=1 // pred_check
      %p50 = pneg %p49
    $region23: #{tpu_custom_call.1} parent=1 // pred_check_branch
      %52 = sbr.rel (%p50) target = $region25
    $region24: #{tpu_custom_call.1} parent=1 // pred_region
      %53 = vst [vmem:[#allocation2] sm:$0xff] 0.0
      %54 = vst [vmem:[#allocation2 + $0x8] sm:$0xff] 0.0
    $region25: #{tpu_custom_call.1} parent=1 // pred_fallthru
      _
    %v55 = vld [vmem:[#allocation3] sm:$0xff]
    %v56 = vld [vmem:[#allocation3 + $0x8] sm:$0xff]
    %v57 = vld [vmem:[#allocation6] sm:$0xff]
    %v58 = vld [vmem:[#allocation6 + $0x8] sm:$0xff]
    %v59 = vsub.f32 %v55, %v57
    %v60 = vsub.f32 %v56, %v58
    %v61 = vmul.f32 %v59, %v59
    %v62 = vmul.f32 %v60, %v60
    %v63 = vld [vmem:[#allocation2] sm:$0xff]
    %v64 = vld [vmem:[#allocation2 + $0x8] sm:$0xff]
    %v65 = vadd.f32 %v63, %v61
    %v66 = vadd.f32 %v64, %v62
    %67 = vst [vmem:[#allocation2] sm:$0xff] %v65
    %68 = vst [vmem:[#allocation2 + $0x8] sm:$0xff] %v66
    // Predicated region
    $region26: #{tpu_custom_call.1} parent=1 // pred_check
      %p69 = pneg %p49
    $region27: #{tpu_custom_call.1} parent=1 // pred_check_branch
      %71 = sbr.rel (%p69) target = $region29
    $region28: #{tpu_custom_call.1} parent=1 // pred_region
      %v72 = vld [vmem:[#allocation2] sm:$0xff]
      %v73 = vld [vmem:[#allocation2 + $0x8] sm:$0xff]
      %v74 = vrot.slane %v72, 4
      %v75 = vadd.f32 %v72, %v74
      %v76 = vrot.slane %v75, 2
      %v77 = vadd.f32 %v75, %v76
      %v78 = vrot.slane %v77, 1
      %v79 = vadd.f32 %v77, %v78
      %v80 = vrot.slane %v73, 4
      %v81 = vadd.f32 %v73, %v80
      %v82 = vrot.slane %v81, 2
      %v83 = vadd.f32 %v81, %v82
      %v84 = vrot.slane %v83, 1
      %v85 = vadd.f32 %v83, %v84
      %v86 = vld [vmem:[%s2] sm:$0x3]
      %v88 = vlaneseq
      %v89 = vshrl.u32 %v88, 7
      %v90 = vsub.s32 0, %v89
      %v91 = vrot.slane %v86, %v90
      %v92 = vlaneseq
      %v93 = vshrl.u32 %v92, 7
      %v94 = vsub.s32 1, %v93
      %v95 = vrot.slane %v86, %v94
      %v98 = vmul.f32 %v79, %v91
      %v99 = vmul.f32 %v85, %v95
      %v102 = vcombine.low %v98, %v99
      %v104 = vunpack.c.l.s4 1966171168
      %v105 = vunpack.c.0.s8 %v104
      %v106 = vlaneseq
      %v107 = vshrl.u32 %v106, 7
      %v108 = vsub.s32 %v105, %v107
      %v109 = vrot.slane %v102, %v108
      %v111 = vunpack.c.l.s4 1966171168
      %v112 = vunpack.c.0.s8 %v111
      %v113 = vlaneseq
      %v114 = vshrl.u32 %v113, 7
      %v115 = vsub.s32 %v112, %v114
      %v116 = vrot.slane %v109, %v115
      %v118 = vlaneseq
      %vm119 = vcmp.ge.s32.totalorder %v118, 0
      %vm120 = vcmp.lt.s32.totalorder %v118, 256
      %vm121 = vmand %vm119, %vm120
      %122 = vst.msk [vmem:[#allocation8] sm:$0x3] %vm121, %v116
    $region29: #{tpu_custom_call.1} parent=1 // pred_fallthru
      _
    // Predicated region
    $region30: #{tpu_custom_call.1} parent=1 // pred_check
      _
    $region31: #{tpu_custom_call.1} parent=1 // pred_check_branch
      %124 = sbr.rel (0) target = $region33
    $region32: #{tpu_custom_call.1} parent=1 // pred_region
      %s126 = ssub.s32 32, 32
      %127 = vsyncadd [#allocation5], %s126
      %s129 = sshll.u32 [#allocation8], 4
      %s130 = int_to_ptr.vmem [resolvable:$true] %s129
      %132 = dma.vmem_to_hbm [thread:$0]  %s130, 32, %s3, [#allocation5]
    $region33: #{tpu_custom_call.1} parent=1 // pred_fallthru
      _
    // Predicated region
    $region34: #{tpu_custom_call.1} parent=1 // pred_check
      _
    $region35: #{tpu_custom_call.1} parent=1 // pred_check_branch
      %134 = sbr.rel (0) target = $region37
    $region36: #{tpu_custom_call.1} parent=1 // pred_region
      %135 = dma.done [#allocation5], 32
    $region37: #{tpu_custom_call.1} parent=1 // pred_fallthru
      _
    %136 = vsyncpa [#allocation4], 1
    %137 = vsyncpa [#allocation7], 1
    %138 = vsyncpa [#allocation5], 1

</llo_original>
